<compile_context>
chip_gen: v6e
topology: v6e:2x2x1
jax: 0.10.0
libtpu: 0.0.40
codegen_flags: <defaults>
</compile_context>

<pallas_src>
import jax
import jax.numpy as jnp
from jax.experimental import pallas as pl
from jax.experimental.pallas import tpu as pltpu

BN_EPS = 1e-5
L2_EPS = 1e-12
MAG_HIDDEN = (256, 128, 64)   # mag_mlp hidden widths, final out = 1


# --------------------------------- kernel ---------------------------------

def make_kernel(S, T, num_layers):
    """Fused forward kernel over packed parameter slabs.

    Inputs (refs):
        x_a      (TB, S)            f32
        embed_ab (TB, T)            f32
        w_in     (S+T, S+256)       bf16   [trunk W0 | mag W0'] (BN folded)
        w_mid    (NL*S+256+S, S)    bf16   trunk W1..Wlast, mag W1', W2' (padded)
        vec      (1, (NL+3)*S+256)  f32    all biases + final mag weight row
    Output:
        out      (TB, S) = F.normalize(x, dim=1) * magnitude
    """
    NL = num_layers
    M0 = MAG_HIDDEN[0]                     # 256

    # Static row offsets into w_mid.
    ROW_WM1 = NL * S
    ROW_WM2 = ROW_WM1 + M0
    # Static lane offsets into vec.
    OFF_BMID = S + M0                      # after fused [b0 | bm0]
    OFF_BM1 = OFF_BMID + (NL - 1) * S
    OFF_BM2 = OFF_BM1 + S
    OFF_WFIN = OFF_BM2 + S

    def kernel(x_a_ref, e_ref, w_in_ref, w_mid_ref, vec_ref, out_ref):
        xa = x_a_ref[...]                                   # (TB, S) f32
        e = e_ref[...]                                      # (TB, T) f32
        # Lane-aligned concat in VMEM (x_a is 128-lane aligned); never in HBM.
        x_cat = jnp.concatenate([xa, e], axis=1).astype(jnp.bfloat16)

        # ---- fused first layer: trunk-0 and mag-0 in ONE (S+T)x(S+256) dot --
        y0 = (jnp.dot(x_cat, w_in_ref[...], preferred_element_type=jnp.float32)
              + vec_ref[:, 0:S + M0])
        x = y0[:, 0:S]                                      # trunk layer-0 out
        h = jnp.maximum(y0[:, S:S + M0], 0.0)               # mag layer-0 + ReLU

        # ---- residual trunk (single-Linear MLPs: no BN / activation) --------
        last_x = x
        for k in range(NL):                                 # mlps[1:]
            w = w_mid_ref[k * S:(k + 1) * S, :]
            y = jnp.dot(x.astype(jnp.bfloat16), w,
                        preferred_element_type=jnp.float32)
            if k < NL - 1:                                  # last layer: no bias
                y = y + vec_ref[:, OFF_BMID + k * S:OFF_BMID + (k + 1) * S]
            if k % 2 == 0:
                x = y
            else:
                x = last_x + y
                last_x = x

        # ---- magnitude MLP layers 1..2 (BN folded, Dropout identity) --------
        h = jnp.dot(h.astype(jnp.bfloat16), w_mid_ref[ROW_WM1:ROW_WM1 + M0, :],
                    preferred_element_type=jnp.float32)
        h = jnp.maximum(h + vec_ref[:, OFF_BM1:OFF_BM1 + S], 0.0)
        h = jnp.dot(h.astype(jnp.bfloat16), w_mid_ref[ROW_WM2:ROW_WM2 + S, :],
                    preferred_element_type=jnp.float32)
        h = jnp.maximum(h + vec_ref[:, OFF_BM2:OFF_BM2 + S], 0.0)

        # final (64 -> 1, no bias) as VPU multiply + lane reduction
        mag = jnp.sum(h * vec_ref[:, OFF_WFIN:OFF_WFIN + S],
                      axis=1, keepdims=True)                # (TB, 1)

        # ---- fused normalize * magnitude ------------------------------------
        sumsq = jnp.sum(x * x, axis=1, keepdims=True)
        inv = jax.lax.rsqrt(jnp.maximum(sumsq, L2_EPS * L2_EPS))
        out_ref[...] = x * (mag * inv)

    return kernel


# ------------------------------ parameter prep ------------------------------

def prepare_params(raw_params, shape_latent_dim, text_embed_dim, num_layers,
                   weight_dtype=jnp.bfloat16):
    """Fold eval-mode BN into the preceding Linear and pack everything into
    three slabs: (w_in bf16, w_mid bf16, vec f32)."""
    S, T = shape_latent_dim, text_embed_dim
    NL = num_layers
    M0, M1, M2 = MAG_HIDDEN
    assert S % 128 == 0, "shape_latent_dim must be a multiple of 128"

    def pad2d(a, rows, cols):
        r, c = a.shape
        return jnp.pad(a, ((0, rows - r), (0, cols - c)))

    it = iter(raw_params)
    W0, b0 = next(it), next(it)                              # (S+T, S), (1, S)
    trunk_w, trunk_b = [], []
    for _ in range(NL - 1):
        trunk_w.append(next(it)); trunk_b.append(next(it))   # (S,S), (1,S)
    W_last = next(it)                                        # (S, S)

    mag_w, mag_b = [], []
    for _ in MAG_HIDDEN:
        W, b = next(it), next(it)
        gamma, beta, mean, var = next(it), next(it), next(it), next(it)
        scale = gamma * jax.lax.rsqrt(var + BN_EPS)          # (1, h)
        mag_w.append(W * scale)                              # W' = W * scale
        mag_b.append((b - mean) * scale + beta)              # b'
    W_fin = next(it)                                         # (64, 1)

    # Slab A: fused first-layer weight [trunk W0 | mag W0'] -> (S+T, S+256)
    w_in = jnp.concatenate([W0, mag_w[0]], axis=1).astype(weight_dtype)

    # Slab B: all later matmul weights, stacked along rows, S columns each.
    blocks = [pad2d(w, S, S) for w in trunk_w] + [pad2d(W_last, S, S)]
    blocks.append(pad2d(mag_w[1], M0, S))                    # (256,128) -> (256,S)
    blocks.append(pad2d(mag_w[2], S, S))                     # (128, 64) -> (S,  S)
    w_mid = jnp.concatenate(blocks, axis=0).astype(weight_dtype)

    # Slab C: biases + final magnitude weight row, one (1, W) f32 row.
    def pad_row(v, width):
        return jnp.pad(v, ((0, 0), (0, width - v.shape[1])))
    vecs = [b0, mag_b[0]]                                    # fused layer-0 bias
    vecs += trunk_b                                          # NL-1 trunk biases
    vecs += [pad_row(mag_b[1], S), pad_row(mag_b[2], S), pad_row(W_fin.T, S)]
    vec = jnp.concatenate(vecs, axis=1).astype(jnp.float32)

    return w_in, w_mid, vec


# ------------------------------ wrapper / call ------------------------------

def mlp_latent_mapper_residual(x_a, embed_ab, packed, num_layers,
                               batch_tile=256):
    """Calls the fused Pallas kernel. `packed` must come from prepare_params."""
    B, S = x_a.shape
    T = embed_ab.shape[1]
    w_in, w_mid, vec = packed
    M0 = MAG_HIDDEN[0]

    # Batch tiling: one grid step at tiny B; multiple parallel steps otherwise
    # (weights map to a constant block so they stay VMEM-resident).
    if B > batch_tile and B % batch_tile == 0:
        tb = batch_tile
    else:
        tb = B
    grid = (B // tb,)

    flops = 2 * B * ((S + T) * (S + M0)            # fused first layer
                     + num_layers * S * S          # trunk layers
                     + M0 * S + S * S              # mag layers 1, 2 (padded)
                     + S)                          # final reduce
    bytes_accessed = int(x_a.size * 4 + embed_ab.size * 4 + w_in.size * 2
                         + w_mid.size * 2 + vec.size * 4 + B * S * 4)

    return pl.pallas_call(
        make_kernel(S, T, num_layers),
        out_shape=jax.ShapeDtypeStruct((B, S), jnp.float32),
        grid=grid,
        in_specs=[
            pl.BlockSpec((tb, S), lambda i: (i, 0)),
            pl.BlockSpec((tb, T), lambda i: (i, 0)),
            pl.BlockSpec(w_in.shape, lambda i: (0, 0)),   # VMEM-resident weights
            pl.BlockSpec(w_mid.shape, lambda i: (0, 0)),
            pl.BlockSpec(vec.shape, lambda i: (0, 0)),
        ],
        out_specs=pl.BlockSpec((tb, S), lambda i: (i, 0)),
        compiler_params=pltpu.CompilerParams(
            dimension_semantics=("parallel",)),
        cost_estimate=pl.CostEstimate(
            flops=flops, transcendentals=B, bytes_accessed=bytes_accessed),
    )(x_a, embed_ab, w_in, w_mid, vec)


# ------------------------- deterministic parameter init -------------------------

def _linear(key, fan_in, fan_out, bias=True):
    k1, k2 = jax.random.split(key)
    bound = fan_in ** -0.5
    W = jax.random.uniform(k1, (fan_in, fan_out), jnp.float32, -bound, bound)
    if bias:
        b = jax.random.uniform(k2, (1, fan_out), jnp.float32, -bound, bound)
        return [W, b]
    return [W]


def _batchnorm(key, dim):
    k1, k2, k3, k4 = jax.random.split(key, 4)
    gamma = jax.random.uniform(k1, (1, dim), jnp.float32, 0.5, 1.5)
    beta = jax.random.uniform(k2, (1, dim), jnp.float32, -0.5, 0.5)
    mean = jax.random.uniform(k3, (1, dim), jnp.float32, -0.1, 0.1)
    var = jax.random.uniform(k4, (1, dim), jnp.float32, 0.5, 1.5)
    return [gamma, beta, mean, var]


def init_params(key, shape_latent_dim, text_embed_dim, num_layers):
    S, T = shape_latent_dim, text_embed_dim
    params = []
    keys = iter(jax.random.split(key, 64))

    # trunk: mlps[0] (S+T -> S, bias), mlps[1..num_layers-1] (S -> S, bias),
    #        mlps[num_layers] (S -> S, no bias)
    params += _linear(next(keys), S + T, S, bias=True)
    for _ in range(num_layers - 1):
        params += _linear(next(keys), S, S, bias=True)
    params += _linear(next(keys), S, S, bias=False)

    # mag_mlp: (S+T -> 256 -> 128 -> 64 -> 1), BN+ReLU+Dropout between layers
    prev = S + T
    for h in MAG_HIDDEN:
        params += _linear(next(keys), prev, h, bias=True)
        params += _batchnorm(next(keys), h)
        prev = h
    params += _linear(next(keys), prev, 1, bias=False)
    return params


# ------------------------------ pure-JAX references ------------------------------

def reference_f32(x_a, embed_ab, raw_params, num_layers):
    """Full-precision reference matching the PyTorch module in eval mode."""
    it = iter(raw_params)
    x0 = jnp.concatenate([x_a, embed_ab], axis=1)

    W0, b0 = next(it), next(it)
    x = x0 @ W0 + b0
    last_x = x
    mids = [(next(it), next(it)) for _ in range(num_layers - 1)]
    W_last = next(it)
    for k in range(num_layers):
        if k < num_layers - 1:
            Wk, bk = mids[k]
            y = x @ Wk + bk
        else:
            y = x @ W_last
        if k % 2 == 0:
            x = y
        else:
            x = last_x + y
            last_x = x

    norm = jnp.sqrt(jnp.sum(x * x, axis=1, keepdims=True))
    dir_vec = x / jnp.maximum(norm, L2_EPS)

    h = x0
    for _ in range(len(MAG_HIDDEN)):
        W, b = next(it), next(it)
        gamma, beta, mean, var = next(it), next(it), next(it), next(it)
        h = h @ W + b
        h = (h - mean) * jax.lax.rsqrt(var + BN_EPS) * gamma + beta
        h = jnp.maximum(h, 0.0)
    W_mag_final = next(it)
    mag = h @ W_mag_final
    return dir_vec * mag


def reference_packed(x_a, embed_ab, packed, num_layers):
    """Plain-JAX replay of the kernel's exact math on the packed slabs."""
    w_in, w_mid, vec = packed
    S = x_a.shape[1]
    NL = num_layers
    M0 = MAG_HIDDEN[0]
    ROW_WM1 = NL * S
    ROW_WM2 = ROW_WM1 + M0
    OFF_BMID = S + M0
    OFF_BM1 = OFF_BMID + (NL - 1) * S
    OFF_BM2 = OFF_BM1 + S
    OFF_WFIN = OFF_BM2 + S

    x_cat = jnp.concatenate([x_a, embed_ab], axis=1).astype(jnp.bfloat16)
    y0 = jnp.dot(x_cat, w_in, preferred_element_type=jnp.float32) + vec[:, :S + M0]
    x = y0[:, :S]
    h = jnp.maximum(y0[:, S:S + M0], 0.0)
    last_x = x
    for k in range(NL):
        w = w_mid[k * S:(k + 1) * S, :]
        y = jnp.dot(x.astype(jnp.bfloat16), w, preferred_element_type=jnp.float32)
        if k < NL - 1:
            y = y + vec[:, OFF_BMID + k * S:OFF_BMID + (k + 1) * S]
        if k % 2 == 0:
            x = y
        else:
            x = last_x + y
            last_x = x
    h = jnp.dot(h.astype(jnp.bfloat16), w_mid[ROW_WM1:ROW_WM1 + M0, :],
                preferred_element_type=jnp.float32)
    h = jnp.maximum(h + vec[:, OFF_BM1:OFF_BM1 + S], 0.0)
    h = jnp.dot(h.astype(jnp.bfloat16), w_mid[ROW_WM2:ROW_WM2 + S, :],
                preferred_element_type=jnp.float32)
    h = jnp.maximum(h + vec[:, OFF_BM2:OFF_BM2 + S], 0.0)
    mag = jnp.sum(h * vec[:, OFF_WFIN:OFF_WFIN + S], axis=1, keepdims=True)

    sumsq = jnp.sum(x * x, axis=1, keepdims=True)
    inv = jax.lax.rsqrt(jnp.maximum(sumsq, L2_EPS * L2_EPS))
    return x * (mag * inv)


# ------------------------------------- main -------------------------------------

if __name__ == "__main__":
    shape_latent_dim = 128
    text_embed_dim = 64
    num_layers = 3
    batch = 8

    key = jax.random.PRNGKey(0)
    k_x, k_e, k_p, k_x2, k_e2 = jax.random.split(key, 5)
    x_a = jax.random.normal(k_x, (batch, shape_latent_dim), jnp.float32)
    embed_ab = jax.random.normal(k_e, (batch, text_embed_dim), jnp.float32)

    raw_params = init_params(k_p, shape_latent_dim, text_embed_dim, num_layers)
    packed = prepare_params(raw_params, shape_latent_dim, text_embed_dim,
                            num_layers)

    out = jax.block_until_ready(
        mlp_latent_mapper_residual(x_a, embed_ab, packed, num_layers))
    assert out.shape == (batch, shape_latent_dim)

    # 1) structural check against a reference with matched numerics (tight tol)
    ref_m = jax.block_until_ready(
        reference_packed(x_a, embed_ab, packed, num_layers))
    assert jnp.allclose(out, ref_m, atol=2e-3, rtol=2e-3), (
        float(jnp.max(jnp.abs(out - ref_m))))

    # 2) semantic check against the full-f32 PyTorch-eval reference
    #    (looser tol: matmul operands are bf16 in the kernel)
    ref_f = jax.block_until_ready(
        reference_f32(x_a, embed_ab, raw_params, num_layers))
    assert jnp.allclose(out, ref_f, atol=3e-2, rtol=3e-2), (
        float(jnp.max(jnp.abs(out - ref_f))))

    # 3) exercise the multi-step batch grid path (weights VMEM-resident)
    big_b = 16
    x2 = jax.random.normal(k_x2, (big_b, shape_latent_dim), jnp.float32)
    e2 = jax.random.normal(k_e2, (big_b, text_embed_dim), jnp.float32)
    out2 = jax.block_until_ready(
        mlp_latent_mapper_residual(x2, e2, packed, num_layers, batch_tile=8))
    ref2 = jax.block_until_ready(
        reference_packed(x2, e2, packed, num_layers))
    assert jnp.allclose(out2, ref2, atol=2e-3, rtol=2e-3), (
        float(jnp.max(jnp.abs(out2 - ref2))))

    print("KERNEL_OK")
</pallas_src>

<mosaic_0001>
module attributes {stable_mosaic.version = 11 : i64} {
  func.func @kernel(%arg0: i32, %arg1: memref<8x128xf32, #tpu.memory_space<vmem>>, %arg2: memref<8x64xf32, #tpu.memory_space<vmem>>, %arg3: memref<192x384xbf16, #tpu.memory_space<vmem>>, %arg4: memref<768x128xbf16, #tpu.memory_space<vmem>>, %arg5: memref<1x1024xf32, #tpu.memory_space<vmem>>, %arg6: memref<8x128xf32, #tpu.memory_space<vmem>>) attributes {dimension_semantics = [#tpu.dimension_semantics<parallel>], iteration_bounds = array<i64: 1>, scalar_prefetch = 0 : i64, scratch_operands = 0 : i64, tpu.core_type = #tpu.core_type<tc>, window_params = [{transform_indices = @transform_0, window_bounds = array<i64: 8, 128>}, {transform_indices = @transform_1, window_bounds = array<i64: 8, 64>}, {pipeline_mode = #tpu.pipeline_mode<synchronous>, transform_indices = @transform_2, window_bounds = array<i64: 192, 384>}, {pipeline_mode = #tpu.pipeline_mode<synchronous>, transform_indices = @transform_3, window_bounds = array<i64: 768, 128>}, {pipeline_mode = #tpu.pipeline_mode<synchronous>, transform_indices = @transform_4, window_bounds = array<i64: 1, 1024>}, {transform_indices = @transform_5, window_bounds = array<i64: 8, 128>}]} {
    %c0 = arith.constant 0 : index
    %c0_0 = arith.constant 0 : index
    %0 = vector.load %arg1[%c0, %c0_0] : memref<8x128xf32, #tpu.memory_space<vmem>>, vector<8x128xf32>
    %c0_1 = arith.constant 0 : index
    %c0_2 = arith.constant 0 : index
    %1 = vector.load %arg2[%c0_1, %c0_2] : memref<8x64xf32, #tpu.memory_space<vmem>>, vector<8x64xf32>
    %2 = tpu.concatenate %0, %1 in 1 : vector<8x128xf32>, vector<8x64xf32> -> vector<8x192xf32>
    %3 = arith.truncf %2 : vector<8x192xf32> to vector<8x192xbf16>
    %c0_3 = arith.constant 0 : index
    %c0_4 = arith.constant 0 : index
    %4 = vector.load %arg3[%c0_3, %c0_4] : memref<192x384xbf16, #tpu.memory_space<vmem>>, vector<192x384xbf16>
    %cst = arith.constant dense<0.000000e+00> : vector<8x384xf32>
    %5 = tpu.matmul %3, %4, %cst {dimension_numbers = #tpu.dot_dimension_numbers<[1], [0], [0], [1], [0, 0, 1, 1], [], []>} : vector<8x192xbf16>, vector<192x384xbf16>, vector<8x384xf32> -> vector<8x384xf32>
    %c0_5 = arith.constant 0 : index
    %c0_6 = arith.constant 0 : index
    %6 = vector.load %arg5[%c0_5, %c0_6] : memref<1x1024xf32, #tpu.memory_space<vmem>>, vector<1x384xf32>
    %7 = vector.broadcast %6 : vector<1x384xf32> to vector<8x384xf32>
    %8 = arith.addf %5, %7 : vector<8x384xf32>
    %9 = vector.extract_strided_slice %8 {offsets = [0, 0], sizes = [8, 128], strides = [1, 1]} : vector<8x384xf32> to vector<8x128xf32>
    %10 = vector.extract_strided_slice %8 {offsets = [0, 128], sizes = [8, 256], strides = [1, 1]} : vector<8x384xf32> to vector<8x256xf32>
    %cst_7 = arith.constant 0.000000e+00 : f32
    %11 = vector.broadcast %cst_7 : f32 to vector<8x256xf32>
    %12 = arith.maximumf %10, %11 : vector<8x256xf32>
    %c0_8 = arith.constant 0 : index
    %c0_9 = arith.constant 0 : index
    %13 = vector.load %arg4[%c0_8, %c0_9] : memref<768x128xbf16, #tpu.memory_space<vmem>>, vector<128x128xbf16>
    %14 = arith.truncf %9 : vector<8x128xf32> to vector<8x128xbf16>
    %cst_10 = arith.constant dense<0.000000e+00> : vector<8x128xf32>
    %15 = tpu.matmul %14, %13, %cst_10 {dimension_numbers = #tpu.dot_dimension_numbers<[1], [0], [0], [1], [0, 0, 1, 1], [], []>} : vector<8x128xbf16>, vector<128x128xbf16>, vector<8x128xf32> -> vector<8x128xf32>
    %c0_11 = arith.constant 0 : index
    %c384 = arith.constant 384 : index
    %16 = vector.load %arg5[%c0_11, %c384] : memref<1x1024xf32, #tpu.memory_space<vmem>>, vector<1x128xf32>
    %17 = vector.broadcast %16 : vector<1x128xf32> to vector<8x128xf32>
    %18 = arith.addf %15, %17 : vector<8x128xf32>
    %c128 = arith.constant 128 : index
    %c0_12 = arith.constant 0 : index
    %19 = vector.load %arg4[%c128, %c0_12] : memref<768x128xbf16, #tpu.memory_space<vmem>>, vector<128x128xbf16>
    %20 = arith.truncf %18 : vector<8x128xf32> to vector<8x128xbf16>
    %cst_13 = arith.constant dense<0.000000e+00> : vector<8x128xf32>
    %21 = tpu.matmul %20, %19, %cst_13 {dimension_numbers = #tpu.dot_dimension_numbers<[1], [0], [0], [1], [0, 0, 1, 1], [], []>} : vector<8x128xbf16>, vector<128x128xbf16>, vector<8x128xf32> -> vector<8x128xf32>
    %c0_14 = arith.constant 0 : index
    %c512 = arith.constant 512 : index
    %22 = vector.load %arg5[%c0_14, %c512] : memref<1x1024xf32, #tpu.memory_space<vmem>>, vector<1x128xf32>
    %23 = vector.broadcast %22 : vector<1x128xf32> to vector<8x128xf32>
    %24 = arith.addf %21, %23 : vector<8x128xf32>
    %25 = arith.addf %9, %24 : vector<8x128xf32>
    %c256 = arith.constant 256 : index
    %c0_15 = arith.constant 0 : index
    %26 = vector.load %arg4[%c256, %c0_15] : memref<768x128xbf16, #tpu.memory_space<vmem>>, vector<128x128xbf16>
    %27 = arith.truncf %25 : vector<8x128xf32> to vector<8x128xbf16>
    %cst_16 = arith.constant dense<0.000000e+00> : vector<8x128xf32>
    %28 = tpu.matmul %27, %26, %cst_16 {dimension_numbers = #tpu.dot_dimension_numbers<[1], [0], [0], [1], [0, 0, 1, 1], [], []>} : vector<8x128xbf16>, vector<128x128xbf16>, vector<8x128xf32> -> vector<8x128xf32>
    %29 = arith.truncf %12 : vector<8x256xf32> to vector<8x256xbf16>
    %c384_17 = arith.constant 384 : index
    %c0_18 = arith.constant 0 : index
    %30 = vector.load %arg4[%c384_17, %c0_18] : memref<768x128xbf16, #tpu.memory_space<vmem>>, vector<256x128xbf16>
    %cst_19 = arith.constant dense<0.000000e+00> : vector<8x128xf32>
    %31 = tpu.matmul %29, %30, %cst_19 {dimension_numbers = #tpu.dot_dimension_numbers<[1], [0], [0], [1], [0, 0, 1, 1], [], []>} : vector<8x256xbf16>, vector<256x128xbf16>, vector<8x128xf32> -> vector<8x128xf32>
    %c0_20 = arith.constant 0 : index
    %c640 = arith.constant 640 : index
    %32 = vector.load %arg5[%c0_20, %c640] : memref<1x1024xf32, #tpu.memory_space<vmem>>, vector<1x128xf32>
    %33 = vector.broadcast %32 : vector<1x128xf32> to vector<8x128xf32>
    %34 = arith.addf %31, %33 : vector<8x128xf32>
    %cst_21 = arith.constant 0.000000e+00 : f32
    %35 = vector.broadcast %cst_21 : f32 to vector<8x128xf32>
    %36 = arith.maximumf %34, %35 : vector<8x128xf32>
    %37 = arith.truncf %36 : vector<8x128xf32> to vector<8x128xbf16>
    %c640_22 = arith.constant 640 : index
    %c0_23 = arith.constant 0 : index
    %38 = vector.load %arg4[%c640_22, %c0_23] : memref<768x128xbf16, #tpu.memory_space<vmem>>, vector<128x128xbf16>
    %cst_24 = arith.constant dense<0.000000e+00> : vector<8x128xf32>
    %39 = tpu.matmul %37, %38, %cst_24 {dimension_numbers = #tpu.dot_dimension_numbers<[1], [0], [0], [1], [0, 0, 1, 1], [], []>} : vector<8x128xbf16>, vector<128x128xbf16>, vector<8x128xf32> -> vector<8x128xf32>
    %c0_25 = arith.constant 0 : index
    %c768 = arith.constant 768 : index
    %40 = vector.load %arg5[%c0_25, %c768] : memref<1x1024xf32, #tpu.memory_space<vmem>>, vector<1x128xf32>
    %41 = vector.broadcast %40 : vector<1x128xf32> to vector<8x128xf32>
    %42 = arith.addf %39, %41 : vector<8x128xf32>
    %cst_26 = arith.constant 0.000000e+00 : f32
    %43 = vector.broadcast %cst_26 : f32 to vector<8x128xf32>
    %44 = arith.maximumf %42, %43 : vector<8x128xf32>
    %c0_27 = arith.constant 0 : index
    %c896 = arith.constant 896 : index
    %45 = vector.load %arg5[%c0_27, %c896] : memref<1x1024xf32, #tpu.memory_space<vmem>>, vector<1x128xf32>
    %46 = vector.broadcast %45 : vector<1x128xf32> to vector<8x128xf32>
    %47 = arith.mulf %44, %46 : vector<8x128xf32>
    %cst_28 = arith.constant dense<0.000000e+00> : vector<8xf32>
    %48 = vector.multi_reduction <add>, %47, %cst_28 [1] : vector<8x128xf32> to vector<8xf32>
    %49 = vector.shape_cast %48 : vector<8xf32> to vector<8x1xf32>
    %50 = arith.mulf %28, %28 : vector<8x128xf32>
    %cst_29 = arith.constant dense<0.000000e+00> : vector<8xf32>
    %51 = vector.multi_reduction <add>, %50, %cst_29 [1] : vector<8x128xf32> to vector<8xf32>
    %52 = vector.shape_cast %51 : vector<8xf32> to vector<8x1xf32>
    %cst_30 = arith.constant 1.000000e-24 : f32
    %53 = vector.broadcast %cst_30 : f32 to vector<8x1xf32>
    %54 = arith.maximumf %52, %53 : vector<8x1xf32>
    %55 = math.rsqrt %54 : vector<8x1xf32>
    %56 = arith.mulf %49, %55 : vector<8x1xf32>
    %57 = vector.broadcast %56 : vector<8x1xf32> to vector<8x128xf32>
    %58 = arith.mulf %28, %57 : vector<8x128xf32>
    %c0_31 = arith.constant 0 : index
    %c0_32 = arith.constant 0 : index
    %59 = vector.load %arg6[%c0_31, %c0_32] : memref<8x128xf32, #tpu.memory_space<vmem>>, vector<8x128xf32>
    tpu.vector_store %arg6[%c0_31, %c0_32], %58 {strides = array<i32>} : memref<8x128xf32, #tpu.memory_space<vmem>>, vector<8x128xf32>,
    return
  }
  func.func @transform_0(%arg0: i32) -> (i32, i32) {
    %c0_i32 = arith.constant 0 : i32
    %c0_i32_0 = arith.constant 0 : i32
    return %arg0, %c0_i32 : i32, i32
  }
  func.func @transform_1(%arg0: i32) -> (i32, i32) {
    %c0_i32 = arith.constant 0 : i32
    %c0_i32_0 = arith.constant 0 : i32
    return %arg0, %c0_i32 : i32, i32
  }
  func.func @transform_2(%arg0: i32) -> (i32, i32) {
    %c0_i32 = arith.constant 0 : i32
    %c0_i32_0 = arith.constant 0 : i32
    %c0_i32_1 = arith.constant 0 : i32
    return %c0_i32, %c0_i32_0 : i32, i32
  }
  func.func @transform_3(%arg0: i32) -> (i32, i32) {
    %c0_i32 = arith.constant 0 : i32
    %c0_i32_0 = arith.constant 0 : i32
    %c0_i32_1 = arith.constant 0 : i32
    return %c0_i32, %c0_i32_0 : i32, i32
  }
  func.func @transform_4(%arg0: i32) -> (i32, i32) {
    %c0_i32 = arith.constant 0 : i32
    %c0_i32_0 = arith.constant 0 : i32
    %c0_i32_1 = arith.constant 0 : i32
    return %c0_i32, %c0_i32_0 : i32, i32
  }
  func.func @transform_5(%arg0: i32) -> (i32, i32) {
    %c0_i32 = arith.constant 0 : i32
    %c0_i32_0 = arith.constant 0 : i32
    return %arg0, %c0_i32 : i32, i32
  }
}

</mosaic_0001>

<llo_original>
// kernel: tpu_custom_call.1
$region0: #{tpu_custom_call.1}
  #allocation0 [shape = 'u32[]', space=smem, size = 0x4, offset = 0x4, fixed_abs, tag = 'smem constant byte address 0x4 - core index']
  #allocation1 [shape = 'u32[144,128]{1,0:T(1,128)}', space=vmem, size = 0x12000, scoped, tag = 'internal scratch']
  %s0 = inlined_call_operand.hbm [shape: f32[8,128], index: 0, kind: input, shape index: {}]
  %s1 = inlined_call_operand.hbm [shape: f32[8,64], index: 1, kind: input, shape index: {}]
  %s2 = inlined_call_operand.hbm [shape: bf16[192,384], index: 2, kind: input, shape index: {}]
  %s3 = inlined_call_operand.hbm [shape: bf16[768,128], index: 3, kind: input, shape index: {}]
  %s4 = inlined_call_operand.hbm [shape: f32[1,1024], index: 4, kind: input, shape index: {}]
  %s5 = inlined_call_operand.hbm [shape: f32[8,128], index: 5, kind: output, shape index: {}]
  %s6 = sld [smem:[#allocation0]]
  $region50: #{tpu_custom_call.1} parent=0
    _
  %s8 = ssub.s32 1, %s6
  %s9 = scalar_select 0, %s8, %s6
  $region1: #{tpu_custom_call.1} parent=0
    #allocation2 [shape = 'u8[4096]{0}', space=vmem, size = 0x1000, scoped, tag = 'input window, operand 0, single buffered']
    #allocation3 [shape = 's32[1]{0}', space=sflag, size = 0x4, scoped, tag = 'scoped memory for tpu_custom_call.1']
    #allocation4 [shape = 's32[1]{0}', space=sflag, size = 0x4, scoped, tag = 'scoped memory for tpu_custom_call.1']
    #allocation5 [shape = 'u8[4096]{0}', space=vmem, size = 0x1000, scoped, tag = 'input window, operand 1, single buffered']
    #allocation6 [shape = 's32[1]{0}', space=sflag, size = 0x4, scoped, tag = 'scoped memory for tpu_custom_call.1']
    #allocation7 [shape = 'u8[147456]{0}', space=vmem, size = 0x24000, scoped, tag = 'input window, operand 2, single buffered']
    #allocation8 [shape = 'u8[196608]{0}', space=vmem, size = 0x30000, scoped, tag = 'input window, operand 3, single buffered']
    #allocation9 [shape = 's32[1]{0}', space=sflag, size = 0x4, scoped, tag = 'scoped memory for tpu_custom_call.1']
    #allocation10 [shape = 'u8[4096]{0}', space=vmem, size = 0x1000, scoped, tag = 'input window, operand 4, single buffered']
    #allocation11 [shape = 'u8[4096]{0}', space=vmem, size = 0x1000, scoped, tag = 'output window, operand 0, single buffered']
    %10 = vsyncpa [#allocation3], 0
    %11 = vsyncpa [#allocation6], 0
    %12 = vsyncpa [#allocation9], 0
    %13 = vsyncpa [#allocation4], 0
    // Predicated region
    $region2: #{tpu_custom_call.1} parent=1 // pred_check
      _
    $region3: #{tpu_custom_call.1} parent=1 // pred_check_branch
      %15 = sbr.rel (0) target = $region5
    $region4: #{tpu_custom_call.1} parent=1 // pred_region
      %s17 = ssub.s32 128, 128
      %18 = vsyncadd [#allocation3], %s17
      %s20 = sshll.u32 [#allocation2], 4
      %s21 = int_to_ptr.vmem [resolvable:$true] %s20
      %23 = dma.hbm_to_vmem [thread:$0]  %s0, 128, %s21, [#allocation3]
    $region5: #{tpu_custom_call.1} parent=1 // pred_fallthru
      _
    // Predicated region
    $region6: #{tpu_custom_call.1} parent=1 // pred_check
      _
    $region7: #{tpu_custom_call.1} parent=1 // pred_check_branch
      %25 = sbr.rel (0) target = $region9
    $region8: #{tpu_custom_call.1} parent=1 // pred_region
      %s27 = ssub.s32 128, 128
      %28 = vsyncadd [#allocation6], %s27
      %s30 = sshll.u32 [#allocation5], 4
      %s31 = int_to_ptr.vmem [resolvable:$true] %s30
      %33 = dma.hbm_to_vmem [thread:$0]  %s1, 128, %s31, [#allocation6]
    $region9: #{tpu_custom_call.1} parent=1 // pred_fallthru
      _
    // Predicated region
    $region10: #{tpu_custom_call.1} parent=1 // pred_check
      _
    $region11: #{tpu_custom_call.1} parent=1 // pred_check_branch
      %35 = sbr.rel (0) target = $region13
    $region12: #{tpu_custom_call.1} parent=1 // pred_region
      %s37 = ssub.s32 4608, 4608
      %38 = vsyncadd [#allocation6], %s37
      %s39 = sshll.u32 [#allocation7], 4
      %s40 = int_to_ptr.vmem [resolvable:$true] %s39
      %45 = dma.hbm_to_vmem [thread:$0]  %s2, 4608, %s40, [#allocation6], 192, 192, 12
    $region13: #{tpu_custom_call.1} parent=1 // pred_fallthru
      _
    // Predicated region
    $region14: #{tpu_custom_call.1} parent=1 // pred_check
      _
    $region15: #{tpu_custom_call.1} parent=1 // pred_check_branch
      %47 = sbr.rel (0) target = $region17
    $region16: #{tpu_custom_call.1} parent=1 // pred_region
      %s49 = ssub.s32 6144, 6144
      %50 = vsyncadd [#allocation9], %s49
      %s51 = sshll.u32 [#allocation8], 4
      %s52 = int_to_ptr.vmem [resolvable:$true] %s51
      %57 = dma.hbm_to_vmem [thread:$0]  %s3, 6144, %s52, [#allocation9], 64, 64, 4
    $region17: #{tpu_custom_call.1} parent=1 // pred_fallthru
      _
    // Predicated region
    $region18: #{tpu_custom_call.1} parent=1 // pred_check
      _
    $region19: #{tpu_custom_call.1} parent=1 // pred_check_branch
      %59 = sbr.rel (0) target = $region21
    $region20: #{tpu_custom_call.1} parent=1 // pred_region
      %s61 = ssub.s32 128, 128
      %62 = vsyncadd [#allocation9], %s61
      %s64 = sshll.u32 [#allocation10], 4
      %s65 = int_to_ptr.vmem [resolvable:$true] %s64
      %67 = dma.hbm_to_vmem [thread:$0]  %s4, 128, %s65, [#allocation9]
    $region21: #{tpu_custom_call.1} parent=1 // pred_fallthru
      _
    // Predicated region
    $region22: #{tpu_custom_call.1} parent=1 // pred_check
      _
    $region23: #{tpu_custom_call.1} parent=1 // pred_check_branch
      %69 = sbr.rel (0) target = $region25
    $region24: #{tpu_custom_call.1} parent=1 // pred_region
      %70 = dma.done [#allocation3], 128
    $region25: #{tpu_custom_call.1} parent=1 // pred_fallthru
      _
    // Predicated region
    $region26: #{tpu_custom_call.1} parent=1 // pred_check
      _
    $region27: #{tpu_custom_call.1} parent=1 // pred_check_branch
      %72 = sbr.rel (0) target = $region29
    $region28: #{tpu_custom_call.1} parent=1 // pred_region
      %73 = dma.done [#allocation6], 128
    $region29: #{tpu_custom_call.1} parent=1 // pred_fallthru
      _
    // Predicated region
    $region30: #{tpu_custom_call.1} parent=1 // pred_check
      _
    $region31: #{tpu_custom_call.1} parent=1 // pred_check_branch
      %75 = sbr.rel (0) target = $region33
    $region32: #{tpu_custom_call.1} parent=1 // pred_region
      %76 = dma.done [#allocation6], 4608
    $region33: #{tpu_custom_call.1} parent=1 // pred_fallthru
      _
    // Predicated region
    $region34: #{tpu_custom_call.1} parent=1 // pred_check
      _
    $region35: #{tpu_custom_call.1} parent=1 // pred_check_branch
      %78 = sbr.rel (0) target = $region37
    $region36: #{tpu_custom_call.1} parent=1 // pred_region
      %79 = dma.done [#allocation9], 6144
    $region37: #{tpu_custom_call.1} parent=1 // pred_fallthru
      _
    // Predicated region
    $region38: #{tpu_custom_call.1} parent=1 // pred_check
      _
    $region39: #{tpu_custom_call.1} parent=1 // pred_check_branch
      %81 = sbr.rel (0) target = $region41
    $region40: #{tpu_custom_call.1} parent=1 // pred_region
      %82 = dma.done [#allocation9], 128
    $region41: #{tpu_custom_call.1} parent=1 // pred_fallthru
      _
    %v84 = vld [vmem:[#allocation2] sm:$0xff]
    %v85 = vld [vmem:[#allocation5] sm:$0xff]
    %v86 = vpack.c.bf16 %v84, %v84
    %v87 = vpack.c.bf16 %v85, %v85
    %v88 = vld [vmem:[#allocation7] sm:$0xff]
    %v89 = vld [vmem:[#allocation7 + $0x8] sm:$0xf]
    %v90 = vld [vmem:[#allocation7 + $0xc] sm:$0xff]
    %v91 = vld [vmem:[#allocation7 + $0x14] sm:$0xf]
    %v92 = vld [vmem:[#allocation7 + $0x18] sm:$0xff]
    %v93 = vld [vmem:[#allocation7 + $0x20] sm:$0xf]
    %v94 = vld [vmem:[#allocation7 + $0x24] sm:$0xff]
    %v95 = vld [vmem:[#allocation7 + $0x2c] sm:$0xf]
    %v96 = vld [vmem:[#allocation7 + $0x30] sm:$0xff]
    %v97 = vld [vmem:[#allocation7 + $0x38] sm:$0xf]
    %v98 = vld [vmem:[#allocation7 + $0x3c] sm:$0xff]
    %v99 = vld [vmem:[#allocation7 + $0x44] sm:$0xf]
    %v100 = vld [vmem:[#allocation7 + $0x48] sm:$0xff]
    %v101 = vld [vmem:[#allocation7 + $0x50] sm:$0xf]
    %v102 = vld [vmem:[#allocation7 + $0x54] sm:$0xff]
    %v103 = vld [vmem:[#allocation7 + $0x5c] sm:$0xf]
    %v104 = vld [vmem:[#allocation7 + $0x60] sm:$0xff]
    %v105 = vld [vmem:[#allocation7 + $0x68] sm:$0xf]
    %v106 = vld [vmem:[#allocation7 + $0x6c] sm:$0xff]
    %v107 = vld [vmem:[#allocation7 + $0x74] sm:$0xf]
    %v108 = vld [vmem:[#allocation7 + $0x78] sm:$0xff]
    %v109 = vld [vmem:[#allocation7 + $0x80] sm:$0xf]
    %v110 = vld [vmem:[#allocation7 + $0x84] sm:$0xff]
    %v111 = vld [vmem:[#allocation7 + $0x8c] sm:$0xf]
    %v112 = vld [vmem:[#allocation7 + $0x90] sm:$0xff]
    %v113 = vld [vmem:[#allocation7 + $0x98] sm:$0xf]
    %v114 = vld [vmem:[#allocation7 + $0x9c] sm:$0xff]
    %v115 = vld [vmem:[#allocation7 + $0xa4] sm:$0xf]
    %v116 = vld [vmem:[#allocation7 + $0xa8] sm:$0xff]
    %v117 = vld [vmem:[#allocation7 + $0xb0] sm:$0xf]
    %v118 = vld [vmem:[#allocation7 + $0xb4] sm:$0xff]
    %v119 = vld [vmem:[#allocation7 + $0xbc] sm:$0xf]
    %v120 = vld [vmem:[#allocation7 + $0xc0] sm:$0xff]
    %v121 = vld [vmem:[#allocation7 + $0xc8] sm:$0xf]
    %v122 = vld [vmem:[#allocation7 + $0xcc] sm:$0xff]
    %v123 = vld [vmem:[#allocation7 + $0xd4] sm:$0xf]
    %v124 = vld [vmem:[#allocation7 + $0xd8] sm:$0xff]
    %v125 = vld [vmem:[#allocation7 + $0xe0] sm:$0xf]
    %v126 = vld [vmem:[#allocation7 + $0xe4] sm:$0xff]
    %v127 = vld [vmem:[#allocation7 + $0xec] sm:$0xf]
    %v128 = vld [vmem:[#allocation7 + $0xf0] sm:$0xff]
    %v129 = vld [vmem:[#allocation7 + $0xf8] sm:$0xf]
    %v130 = vld [vmem:[#allocation7 + $0xfc] sm:$0xff]
    %v131 = vld [vmem:[#allocation7 + $0x104] sm:$0xf]
    %v132 = vld [vmem:[#allocation7 + $0x108] sm:$0xff]
    %v133 = vld [vmem:[#allocation7 + $0x110] sm:$0xf]
    %v134 = vld [vmem:[#allocation7 + $0x114] sm:$0xff]
    %v135 = vld [vmem:[#allocation7 + $0x11c] sm:$0xf]
    %v136 = vld [vmem:[#allocation10] sm:$0x7]
    %v138 = vlaneseq
    %v139 = vshrl.u32 %v138, 7
    %v140 = vsub.s32 0, %v139
    %v141 = vrot.slane %v136, %v140
    %v142 = vlaneseq
    %v143 = vshrl.u32 %v142, 7
    %v144 = vsub.s32 1, %v143
    %v145 = vrot.slane %v136, %v144
    %v146 = vlaneseq
    %v147 = vshrl.u32 %v146, 7
    %v148 = vsub.s32 2, %v147
    %v149 = vrot.slane %v136, %v148
    %v201 = vunpack.c.l.b16 %v88
    %v202 = vunpack.c.h.b16 %v88
    %v203 = vunpack.c.l.b16 %v89
    %v204 = vunpack.c.l.b16 %v90
    %v205 = vunpack.c.h.b16 %v90
    %v206 = vunpack.c.l.b16 %v91
    %v207 = vunpack.c.l.b16 %v92
    %v208 = vunpack.c.h.b16 %v92
    %v209 = vunpack.c.l.b16 %v93
    %v210 = vunpack.c.l.b16 %v94
    %v211 = vunpack.c.h.b16 %v94
    %v212 = vunpack.c.l.b16 %v95
    %v213 = vunpack.c.l.b16 %v96
    %v214 = vunpack.c.h.b16 %v96
    %v215 = vunpack.c.l.b16 %v97
    %v216 = vunpack.c.l.b16 %v98
    %v217 = vunpack.c.h.b16 %v98
    %v218 = vunpack.c.l.b16 %v99
    %v219 = vunpack.c.l.b16 %v100
    %v220 = vunpack.c.h.b16 %v100
    %v221 = vunpack.c.l.b16 %v101
    %v222 = vunpack.c.l.b16 %v102
    %v223 = vunpack.c.h.b16 %v102
    %v224 = vunpack.c.l.b16 %v103
    %v225 = vunpack.c.l.b16 %v104
    %v226 = vunpack.c.h.b16 %v104
    %v227 = vunpack.c.l.b16 %v105
    %v228 = vunpack.c.l.b16 %v106
    %v229 = vunpack.c.h.b16 %v106
    %v230 = vunpack.c.l.b16 %v107
    %v231 = vunpack.c.l.b16 %v108
    %v232 = vunpack.c.h.b16 %v108
    %v233 = vunpack.c.l.b16 %v109
    %v234 = vunpack.c.l.b16 %v110
    %v235 = vunpack.c.h.b16 %v110
    %v236 = vunpack.c.l.b16 %v111
    %v237 = vunpack.c.l.b16 %v112
    %v238 = vunpack.c.h.b16 %v112
    %v239 = vunpack.c.l.b16 %v113
    %v240 = vunpack.c.l.b16 %v114
    %v241 = vunpack.c.h.b16 %v114
    %v242 = vunpack.c.l.b16 %v115
    %v243 = vunpack.c.l.b16 %v116
    %v244 = vunpack.c.h.b16 %v116
    %v245 = vunpack.c.l.b16 %v117
    %v246 = vunpack.c.l.b16 %v118
    %v247 = vunpack.c.h.b16 %v118
    %v248 = vunpack.c.l.b16 %v119
    %v249 = vunpack.c.l.b16 %v120
    %v250 = vunpack.c.h.b16 %v120
    %v251 = vunpack.c.l.b16 %v121
    %v252 = vunpack.c.l.b16 %v122
    %v253 = vunpack.c.h.b16 %v122
    %v254 = vunpack.c.l.b16 %v123
    %v255 = vunpack.c.l.b16 %v124
    %v256 = vunpack.c.h.b16 %v124
    %v257 = vunpack.c.l.b16 %v125
    %v258 = vunpack.c.l.b16 %v126
    %v259 = vunpack.c.h.b16 %v126
    %v260 = vunpack.c.l.b16 %v127
    %v261 = vunpack.c.l.b16 %v128
    %v262 = vunpack.c.h.b16 %v128
    %v263 = vunpack.c.l.b16 %v129
    %v264 = vunpack.c.l.b16 %v130
    %v265 = vunpack.c.h.b16 %v130
    %v266 = vunpack.c.l.b16 %v131
    %v267 = vunpack.c.l.b16 %v132
    %v268 = vunpack.c.h.b16 %v132
    %v269 = vunpack.c.l.b16 %v133
    %v270 = vunpack.c.l.b16 %v134
    %v271 = vunpack.c.h.b16 %v134
    %v272 = vunpack.c.l.b16 %v135
    %v273 = vpack.c.b16 %v204, %v201
    %v274 = vpack.c.b16 %v205, %v202
    %v275 = vpack.c.b16 %v206, %v203
    %v276 = vpack.c.b16 %v210, %v207
    %v277 = vpack.c.b16 %v211, %v208
    %v278 = vpack.c.b16 %v212, %v209
    %v279 = vpack.c.b16 %v216, %v213
    %v280 = vpack.c.b16 %v217, %v214
    %v281 = vpack.c.b16 %v218, %v215
    %v282 = vpack.c.b16 %v222, %v219
    %v283 = vpack.c.b16 %v223, %v220
    %v284 = vpack.c.b16 %v224, %v221
    %v285 = vpack.c.b16 %v228, %v225
    %v286 = vpack.c.b16 %v229, %v226
    %v287 = vpack.c.b16 %v230, %v227
    %v288 = vpack.c.b16 %v234, %v231
    %v289 = vpack.c.b16 %v235, %v232
    %v290 = vpack.c.b16 %v236, %v233
    %v291 = vpack.c.b16 %v240, %v237
    %v292 = vpack.c.b16 %v241, %v238
    %v293 = vpack.c.b16 %v242, %v239
    %v294 = vpack.c.b16 %v246, %v243
    %v295 = vpack.c.b16 %v247, %v244
    %v296 = vpack.c.b16 %v248, %v245
    %v297 = vpack.c.b16 %v252, %v249
    %v298 = vpack.c.b16 %v253, %v250
    %v299 = vpack.c.b16 %v254, %v251
    %v300 = vpack.c.b16 %v258, %v255
    %v301 = vpack.c.b16 %v259, %v256
    %v302 = vpack.c.b16 %v260, %v257
    %v303 = vpack.c.b16 %v264, %v261
    %v304 = vpack.c.b16 %v265, %v262
    %v305 = vpack.c.b16 %v266, %v263
    %v306 = vpack.c.b16 %v270, %v267
    %v307 = vpack.c.b16 %v271, %v268
    %v308 = vpack.c.b16 %v272, %v269
    %vm345 = vcmask 523264
    %v347 = vsel %vm345, %v87, 0
    %349 = vmatprep.subr.bf16.mxu0 %v295
    %350 = vmatpush1.bf16.msra.mxu0 %v294
    %351 = vmatprep.subr.bf16.mxu0 %v292
    %352 = vmatpush1.bf16.msra.mxu0 %v291
    %353 = vmatprep.subr.bf16.mxu0 %v289
    %354 = vmatpush1.bf16.msra.mxu0 %v288
    %355 = vmatprep.subr.bf16.mxu0 %v286
    %356 = vmatpush1.bf16.msra.mxu0 %v285
    %357 = vmatprep.subr.bf16.mxu0 %v283
    %358 = vmatpush1.bf16.msra.mxu0 %v282
    %359 = vmatprep.subr.bf16.mxu0 %v280
    %360 = vmatpush1.bf16.msra.mxu0 %v279
    %361 = vmatprep.subr.bf16.mxu0 %v277
    %362 = vmatpush1.bf16.msra.mxu0 %v276
    %363 = vmatprep.subr.bf16.mxu0 %v274
    %364 = vmatpush1.bf16.msra.mxu0 %v273
    %365 = vmatprep.subr.bf16.mxu0 0
    %366 = vmatpush2.bf16.msra.mxu0 0
    %367 = vmatprep.subr.bf16.mxu0 0
    %368 = vmatpush2.bf16.msra.mxu0 0
    %369 = vmatprep.subr.bf16.mxu0 0
    %370 = vmatpush2.bf16.msra.mxu0 0
    %371 = vmatprep.subr.bf16.mxu0 0
    %372 = vmatpush2.bf16.msra.mxu0 0
    %373 = vmatprep.subr.bf16.mxu0 %v307
    %374 = vmatpush2.bf16.msra.mxu0 %v306
    %375 = vmatprep.subr.bf16.mxu0 %v304
    %376 = vmatpush2.bf16.msra.mxu0 %v303
    %377 = vmatprep.subr.bf16.mxu0 %v301
    %378 = vmatpush2.bf16.msra.mxu0 %v300
    %379 = vmatprep.subr.bf16.mxu0 %v298
    %380 = vmatpush2.bf16.msra.mxu0 %v297
    %381 = vmatprep.mubr.bf16.mxu0 %v347
    %382 = vmatmul.mubr.bf16.gmra.mxu0 %v86
    %v383 = vpop.f32.mrf.mxu0
    %v384 = vadd.f32 %v141, %v383
    %v385 = vpop.f32.mrf.mxu0
    %v386 = vadd.f32 %v145, %v385
    %v387 = vpop.f32.mrf.mxu0
    %v388 = vpop.f32.mrf.mxu0
    %389 = vdwg.mxu0
    %390 = vmatprep.subr.bf16.mxu0 0
    %391 = vmatpush1.bf16.msra.mxu0 %v296
    %392 = vmatprep.subr.bf16.mxu0 0
    %393 = vmatpush1.bf16.msra.mxu0 %v293
    %394 = vmatprep.subr.bf16.mxu0 0
    %395 = vmatpush1.bf16.msra.mxu0 %v290
    %396 = vmatprep.subr.bf16.mxu0 0
    %397 = vmatpush1.bf16.msra.mxu0 %v287
    %398 = vmatprep.subr.bf16.mxu0 0
    %399 = vmatpush1.bf16.msra.mxu0 %v284
    %400 = vmatprep.subr.bf16.mxu0 0
    %401 = vmatpush1.bf16.msra.mxu0 %v281
    %402 = vmatprep.subr.bf16.mxu0 0
    %403 = vmatpush1.bf16.msra.mxu0 %v278
    %404 = vmatprep.subr.bf16.mxu0 0
    %405 = vmatpush1.bf16.msra.mxu0 %v275
    %406 = vmatprep.subr.bf16.mxu0 0
    %407 = vmatpush2.bf16.msra.mxu0 0
    %408 = vmatprep.subr.bf16.mxu0 0
    %409 = vmatpush2.bf16.msra.mxu0 0
    %410 = vmatprep.subr.bf16.mxu0 0
    %411 = vmatpush2.bf16.msra.mxu0 0
    %412 = vmatprep.subr.bf16.mxu0 0
    %413 = vmatpush2.bf16.msra.mxu0 0
    %414 = vmatprep.subr.bf16.mxu0 0
    %415 = vmatpush2.bf16.msra.mxu0 %v308
    %416 = vmatprep.subr.bf16.mxu0 0
    %417 = vmatpush2.bf16.msra.mxu0 %v305
    %418 = vmatprep.subr.bf16.mxu0 0
    %419 = vmatpush2.bf16.msra.mxu0 %v302
    %420 = vmatprep.subr.bf16.mxu0 0
    %421 = vmatpush2.bf16.msra.mxu0 %v299
    %422 = vmatprep.mubr.bf16.mxu0 %v347
    %423 = vmatmul.mubr.bf16.gmra.mxu0 %v86
    %v424 = vpop.f32.mrf.mxu0
    %v425 = vadd.f32 %v149, %v424
    %v426 = vpop.f32.mrf.mxu0
    %v427 = vpop.f32.mrf.mxu0
    %v428 = vpop.f32.mrf.mxu0
    %429 = vdwg.mxu0
    %v430 = vmax.f32 %v386, 0.0
    %v431 = vmax.f32 %v425, 0.0
    %v432 = vld [vmem:[#allocation8] sm:$0xf]
    %v433 = vld [vmem:[#allocation8 + $0x4] sm:$0xf]
    %v434 = vld [vmem:[#allocation8 + $0x8] sm:$0xf]
    %v435 = vld [vmem:[#allocation8 + $0xc] sm:$0xf]
    %v436 = vld [vmem:[#allocation8 + $0x10] sm:$0xf]
    %v437 = vld [vmem:[#allocation8 + $0x14] sm:$0xf]
    %v438 = vld [vmem:[#allocation8 + $0x18] sm:$0xf]
    %v439 = vld [vmem:[#allocation8 + $0x1c] sm:$0xf]
    %v440 = vld [vmem:[#allocation8 + $0x20] sm:$0xf]
    %v441 = vld [vmem:[#allocation8 + $0x24] sm:$0xf]
    %v442 = vld [vmem:[#allocation8 + $0x28] sm:$0xf]
    %v443 = vld [vmem:[#allocation8 + $0x2c] sm:$0xf]
    %v444 = vld [vmem:[#allocation8 + $0x30] sm:$0xf]
    %v445 = vld [vmem:[#allocation8 + $0x34] sm:$0xf]
    %v446 = vld [vmem:[#allocation8 + $0x38] sm:$0xf]
    %v447 = vld [vmem:[#allocation8 + $0x3c] sm:$0xf]
    %v448 = vpack.c.bf16 %v384, %v384
    %v449 = vld [vmem:[#allocation10 + $0x3] sm:$0x1]
    %v451 = vlaneseq
    %v452 = vshrl.u32 %v451, 7
    %v453 = vsub.s32 0, %v452
    %v454 = vrot.slane %v449, %v453
    %v472 = vunpack.c.l.b16 %v432
    %v473 = vunpack.c.l.b16 %v433
    %v474 = vunpack.c.l.b16 %v434
    %v475 = vunpack.c.l.b16 %v435
    %v476 = vunpack.c.l.b16 %v436
    %v477 = vunpack.c.l.b16 %v437
    %v478 = vunpack.c.l.b16 %v438
    %v479 = vunpack.c.l.b16 %v439
    %v480 = vunpack.c.l.b16 %v440
    %v481 = vunpack.c.l.b16 %v441
    %v482 = vunpack.c.l.b16 %v442
    %v483 = vunpack.c.l.b16 %v443
    %v484 = vunpack.c.l.b16 %v444
    %v485 = vunpack.c.l.b16 %v445
    %v486 = vunpack.c.l.b16 %v446
    %v487 = vunpack.c.l.b16 %v447
    %v488 = vpack.c.b16 %v473, %v472
    %v489 = vpack.c.b16 %v475, %v474
    %v490 = vpack.c.b16 %v477, %v476
    %v491 = vpack.c.b16 %v479, %v478
    %v492 = vpack.c.b16 %v481, %v480
    %v493 = vpack.c.b16 %v483, %v482
    %v494 = vpack.c.b16 %v485, %v484
    %v495 = vpack.c.b16 %v487, %v486
    %504 = vmatprep.subr.bf16.mxu0 0
    %505 = vmatpush1.bf16.msra.mxu0 %v495
    %506 = vmatprep.subr.bf16.mxu0 0
    %507 = vmatpush1.bf16.msra.mxu0 %v494
    %508 = vmatprep.subr.bf16.mxu0 0
    %509 = vmatpush1.bf16.msra.mxu0 %v493
    %510 = vmatprep.subr.bf16.mxu0 0
    %511 = vmatpush1.bf16.msra.mxu0 %v492
    %512 = vmatprep.subr.bf16.mxu0 0
    %513 = vmatpush1.bf16.msra.mxu0 %v491
    %514 = vmatprep.subr.bf16.mxu0 0
    %515 = vmatpush1.bf16.msra.mxu0 %v490
    %516 = vmatprep.subr.bf16.mxu0 0
    %517 = vmatpush1.bf16.msra.mxu0 %v489
    %518 = vmatprep.subr.bf16.mxu0 0
    %519 = vmatpush1.bf16.msra.mxu0 %v488
    %520 = vmatprep.subr.bf16.mxu0 0
    %521 = vmatpush2.bf16.msra.mxu0 0
    %522 = vmatprep.subr.bf16.mxu0 0
    %523 = vmatpush2.bf16.msra.mxu0 0
    %524 = vmatprep.subr.bf16.mxu0 0
    %525 = vmatpush2.bf16.msra.mxu0 0
    %526 = vmatprep.subr.bf16.mxu0 0
    %527 = vmatpush2.bf16.msra.mxu0 0
    %528 = vmatprep.subr.bf16.mxu0 0
    %529 = vmatpush2.bf16.msra.mxu0 0
    %530 = vmatprep.subr.bf16.mxu0 0
    %531 = vmatpush2.bf16.msra.mxu0 0
    %532 = vmatprep.subr.bf16.mxu0 0
    %533 = vmatpush2.bf16.msra.mxu0 0
    %534 = vmatprep.subr.bf16.mxu0 0
    %535 = vmatpush2.bf16.msra.mxu0 0
    %536 = vmatprep.mubr.bf16.mxu0 0
    %537 = vmatmul.mubr.bf16.gmra.mxu0 %v448
    %v538 = vpop.f32.mrf.mxu0
    %v539 = vadd.f32 %v454, %v538
    %v540 = vpop.f32.mrf.mxu0
    %v541 = vpop.f32.mrf.mxu0
    %v542 = vpop.f32.mrf.mxu0
    %543 = vdwg.mxu0
    %v544 = vld [vmem:[#allocation8 + $0x40] sm:$0xf]
    %v545 = vld [vmem:[#allocation8 + $0x44] sm:$0xf]
    %v546 = vld [vmem:[#allocation8 + $0x48] sm:$0xf]
    %v547 = vld [vmem:[#allocation8 + $0x4c] sm:$0xf]
    %v548 = vld [vmem:[#allocation8 + $0x50] sm:$0xf]
    %v549 = vld [vmem:[#allocation8 + $0x54] sm:$0xf]
    %v550 = vld [vmem:[#allocation8 + $0x58] sm:$0xf]
    %v551 = vld [vmem:[#allocation8 + $0x5c] sm:$0xf]
    %v552 = vld [vmem:[#allocation8 + $0x60] sm:$0xf]
    %v553 = vld [vmem:[#allocation8 + $0x64] sm:$0xf]
    %v554 = vld [vmem:[#allocation8 + $0x68] sm:$0xf]
    %v555 = vld [vmem:[#allocation8 + $0x6c] sm:$0xf]
    %v556 = vld [vmem:[#allocation8 + $0x70] sm:$0xf]
    %v557 = vld [vmem:[#allocation8 + $0x74] sm:$0xf]
    %v558 = vld [vmem:[#allocation8 + $0x78] sm:$0xf]
    %v559 = vld [vmem:[#allocation8 + $0x7c] sm:$0xf]
    %v560 = vpack.c.bf16 %v539, %v539
    %v561 = vld [vmem:[#allocation10 + $0x4] sm:$0x1]
    %v563 = vlaneseq
    %v564 = vshrl.u32 %v563, 7
    %v565 = vsub.s32 0, %v564
    %v566 = vrot.slane %v561, %v565
    %v584 = vunpack.c.l.b16 %v544
    %v585 = vunpack.c.l.b16 %v545
    %v586 = vunpack.c.l.b16 %v546
    %v587 = vunpack.c.l.b16 %v547
    %v588 = vunpack.c.l.b16 %v548
    %v589 = vunpack.c.l.b16 %v549
    %v590 = vunpack.c.l.b16 %v550
    %v591 = vunpack.c.l.b16 %v551
    %v592 = vunpack.c.l.b16 %v552
    %v593 = vunpack.c.l.b16 %v553
    %v594 = vunpack.c.l.b16 %v554
    %v595 = vunpack.c.l.b16 %v555
    %v596 = vunpack.c.l.b16 %v556
    %v597 = vunpack.c.l.b16 %v557
    %v598 = vunpack.c.l.b16 %v558
    %v599 = vunpack.c.l.b16 %v559
    %v600 = vpack.c.b16 %v585, %v584
    %v601 = vpack.c.b16 %v587, %v586
    %v602 = vpack.c.b16 %v589, %v588
    %v603 = vpack.c.b16 %v591, %v590
    %v604 = vpack.c.b16 %v593, %v592
    %v605 = vpack.c.b16 %v595, %v594
    %v606 = vpack.c.b16 %v597, %v596
    %v607 = vpack.c.b16 %v599, %v598
    %616 = vmatprep.subr.bf16.mxu0 0
    %617 = vmatpush1.bf16.msra.mxu0 %v607
    %618 = vmatprep.subr.bf16.mxu0 0
    %619 = vmatpush1.bf16.msra.mxu0 %v606
    %620 = vmatprep.subr.bf16.mxu0 0
    %621 = vmatpush1.bf16.msra.mxu0 %v605
    %622 = vmatprep.subr.bf16.mxu0 0
    %623 = vmatpush1.bf16.msra.mxu0 %v604
    %624 = vmatprep.subr.bf16.mxu0 0
    %625 = vmatpush1.bf16.msra.mxu0 %v603
    %626 = vmatprep.subr.bf16.mxu0 0
    %627 = vmatpush1.bf16.msra.mxu0 %v602
    %628 = vmatprep.subr.bf16.mxu0 0
    %629 = vmatpush1.bf16.msra.mxu0 %v601
    %630 = vmatprep.subr.bf16.mxu0 0
    %631 = vmatpush1.bf16.msra.mxu0 %v600
    %632 = vmatprep.subr.bf16.mxu0 0
    %633 = vmatpush2.bf16.msra.mxu0 0
    %634 = vmatprep.subr.bf16.mxu0 0
    %635 = vmatpush2.bf16.msra.mxu0 0
    %636 = vmatprep.subr.bf16.mxu0 0
    %637 = vmatpush2.bf16.msra.mxu0 0
    %638 = vmatprep.subr.bf16.mxu0 0
    %639 = vmatpush2.bf16.msra.mxu0 0
    %640 = vmatprep.subr.bf16.mxu0 0
    %641 = vmatpush2.bf16.msra.mxu0 0
    %642 = vmatprep.subr.bf16.mxu0 0
    %643 = vmatpush2.bf16.msra.mxu0 0
    %644 = vmatprep.subr.bf16.mxu0 0
    %645 = vmatpush2.bf16.msra.mxu0 0
    %646 = vmatprep.subr.bf16.mxu0 0
    %647 = vmatpush2.bf16.msra.mxu0 0
    %648 = vmatprep.mubr.bf16.mxu0 0
    %649 = vmatmul.mubr.bf16.gmra.mxu0 %v560
    %v650 = vpop.f32.mrf.mxu0
    %v651 = vadd.f32 %v566, %v650
    %v652 = vpop.f32.mrf.mxu0
    %v653 = vpop.f32.mrf.mxu0
    %v654 = vpop.f32.mrf.mxu0
    %655 = vdwg.mxu0
    %v656 = vadd.f32 %v384, %v651
    %v657 = vld [vmem:[#allocation8 + $0x80] sm:$0xf]
    %v658 = vld [vmem:[#allocation8 + $0x84] sm:$0xf]
    %v659 = vld [vmem:[#allocation8 + $0x88] sm:$0xf]
    %v660 = vld [vmem:[#allocation8 + $0x8c] sm:$0xf]
    %v661 = vld [vmem:[#allocation8 + $0x90] sm:$0xf]
    %v662 = vld [vmem:[#allocation8 + $0x94] sm:$0xf]
    %v663 = vld [vmem:[#allocation8 + $0x98] sm:$0xf]
    %v664 = vld [vmem:[#allocation8 + $0x9c] sm:$0xf]
    %v665 = vld [vmem:[#allocation8 + $0xa0] sm:$0xf]
    %v666 = vld [vmem:[#allocation8 + $0xa4] sm:$0xf]
    %v667 = vld [vmem:[#allocation8 + $0xa8] sm:$0xf]
    %v668 = vld [vmem:[#allocation8 + $0xac] sm:$0xf]
    %v669 = vld [vmem:[#allocation8 + $0xb0] sm:$0xf]
    %v670 = vld [vmem:[#allocation8 + $0xb4] sm:$0xf]
    %v671 = vld [vmem:[#allocation8 + $0xb8] sm:$0xf]
    %v672 = vld [vmem:[#allocation8 + $0xbc] sm:$0xf]
    %v673 = vpack.c.bf16 %v656, %v656
    %v690 = vunpack.c.l.b16 %v657
    %v691 = vunpack.c.l.b16 %v658
    %v692 = vunpack.c.l.b16 %v659
    %v693 = vunpack.c.l.b16 %v660
    %v694 = vunpack.c.l.b16 %v661
    %v695 = vunpack.c.l.b16 %v662
    %v696 = vunpack.c.l.b16 %v663
    %v697 = vunpack.c.l.b16 %v664
    %v698 = vunpack.c.l.b16 %v665
    %v699 = vunpack.c.l.b16 %v666
    %v700 = vunpack.c.l.b16 %v667
    %v701 = vunpack.c.l.b16 %v668
    %v702 = vunpack.c.l.b16 %v669
    %v703 = vunpack.c.l.b16 %v670
    %v704 = vunpack.c.l.b16 %v671
    %v705 = vunpack.c.l.b16 %v672
    %v706 = vpack.c.b16 %v691, %v690
    %v707 = vpack.c.b16 %v693, %v692
    %v708 = vpack.c.b16 %v695, %v694
    %v709 = vpack.c.b16 %v697, %v696
    %v710 = vpack.c.b16 %v699, %v698
    %v711 = vpack.c.b16 %v701, %v700
    %v712 = vpack.c.b16 %v703, %v702
    %v713 = vpack.c.b16 %v705, %v704
    %722 = vmatprep.subr.bf16.mxu0 0
    %723 = vmatpush1.bf16.msra.mxu0 %v713
    %724 = vmatprep.subr.bf16.mxu0 0
    %725 = vmatpush1.bf16.msra.mxu0 %v712
    %726 = vmatprep.subr.bf16.mxu0 0
    %727 = vmatpush1.bf16.msra.mxu0 %v711
    %728 = vmatprep.subr.bf16.mxu0 0
    %729 = vmatpush1.bf16.msra.mxu0 %v710
    %730 = vmatprep.subr.bf16.mxu0 0
    %731 = vmatpush1.bf16.msra.mxu0 %v709
    %732 = vmatprep.subr.bf16.mxu0 0
    %733 = vmatpush1.bf16.msra.mxu0 %v708
    %734 = vmatprep.subr.bf16.mxu0 0
    %735 = vmatpush1.bf16.msra.mxu0 %v707
    %736 = vmatprep.subr.bf16.mxu0 0
    %737 = vmatpush1.bf16.msra.mxu0 %v706
    %738 = vmatprep.subr.bf16.mxu0 0
    %739 = vmatpush2.bf16.msra.mxu0 0
    %740 = vmatprep.subr.bf16.mxu0 0
    %741 = vmatpush2.bf16.msra.mxu0 0
    %742 = vmatprep.subr.bf16.mxu0 0
    %743 = vmatpush2.bf16.msra.mxu0 0
    %744 = vmatprep.subr.bf16.mxu0 0
    %745 = vmatpush2.bf16.msra.mxu0 0
    %746 = vmatprep.subr.bf16.mxu0 0
    %747 = vmatpush2.bf16.msra.mxu0 0
    %748 = vmatprep.subr.bf16.mxu0 0
    %749 = vmatpush2.bf16.msra.mxu0 0
    %750 = vmatprep.subr.bf16.mxu0 0
    %751 = vmatpush2.bf16.msra.mxu0 0
    %752 = vmatprep.subr.bf16.mxu0 0
    %753 = vmatpush2.bf16.msra.mxu0 0
    %754 = vmatprep.mubr.bf16.mxu0 0
    %755 = vmatmul.mubr.bf16.gmra.mxu0 %v673
    %v756 = vpop.f32.mrf.mxu0
    %v757 = vadd.f32 0.0, %v756
    %v758 = vpop.f32.mrf.mxu0
    %v759 = vpop.f32.mrf.mxu0
    %v760 = vpop.f32.mrf.mxu0
    %761 = vdwg.mxu0
    %v762 = vpack.c.bf16 %v430, %v430
    %v763 = vpack.c.bf16 %v431, %v431
    %v764 = vld [vmem:[#allocation8 + $0xc0] sm:$0xf]
    %v765 = vld [vmem:[#allocation8 + $0xc4] sm:$0xf]
    %v766 = vld [vmem:[#allocation8 + $0xc8] sm:$0xf]
    %v767 = vld [vmem:[#allocation8 + $0xcc] sm:$0xf]
    %v768 = vld [vmem:[#allocation8 + $0xd0] sm:$0xf]
    %v769 = vld [vmem:[#allocation8 + $0xd4] sm:$0xf]
    %v770 = vld [vmem:[#allocation8 + $0xd8] sm:$0xf]
    %v771 = vld [vmem:[#allocation8 + $0xdc] sm:$0xf]
    %v772 = vld [vmem:[#allocation8 + $0xe0] sm:$0xf]
    %v773 = vld [vmem:[#allocation8 + $0xe4] sm:$0xf]
    %v774 = vld [vmem:[#allocation8 + $0xe8] sm:$0xf]
    %v775 = vld [vmem:[#allocation8 + $0xec] sm:$0xf]
    %v776 = vld [vmem:[#allocation8 + $0xf0] sm:$0xf]
    %v777 = vld [vmem:[#allocation8 + $0xf4] sm:$0xf]
    %v778 = vld [vmem:[#allocation8 + $0xf8] sm:$0xf]
    %v779 = vld [vmem:[#allocation8 + $0xfc] sm:$0xf]
    %v780 = vld [vmem:[#allocation8 + $0x100] sm:$0xf]
    %v781 = vld [vmem:[#allocation8 + $0x104] sm:$0xf]
    %v782 = vld [vmem:[#allocation8 + $0x108] sm:$0xf]
    %v783 = vld [vmem:[#allocation8 + $0x10c] sm:$0xf]
    %v784 = vld [vmem:[#allocation8 + $0x110] sm:$0xf]
    %v785 = vld [vmem:[#allocation8 + $0x114] sm:$0xf]
    %v786 = vld [vmem:[#allocation8 + $0x118] sm:$0xf]
    %v787 = vld [vmem:[#allocation8 + $0x11c] sm:$0xf]
    %v788 = vld [vmem:[#allocation8 + $0x120] sm:$0xf]
    %v789 = vld [vmem:[#allocation8 + $0x124] sm:$0xf]
    %v790 = vld [vmem:[#allocation8 + $0x128] sm:$0xf]
    %v791 = vld [vmem:[#allocation8 + $0x12c] sm:$0xf]
    %v792 = vld [vmem:[#allocation8 + $0x130] sm:$0xf]
    %v793 = vld [vmem:[#allocation8 + $0x134] sm:$0xf]
    %v794 = vld [vmem:[#allocation8 + $0x138] sm:$0xf]
    %v795 = vld [vmem:[#allocation8 + $0x13c] sm:$0xf]
    %v796 = vld [vmem:[#allocation10 + $0x5] sm:$0x1]
    %v798 = vlaneseq
    %v799 = vshrl.u32 %v798, 7
    %v800 = vsub.s32 0, %v799
    %v801 = vrot.slane %v796, %v800
    %v835 = vunpack.c.l.b16 %v764
    %v836 = vunpack.c.l.b16 %v765
    %v837 = vunpack.c.l.b16 %v766
    %v838 = vunpack.c.l.b16 %v767
    %v839 = vunpack.c.l.b16 %v768
    %v840 = vunpack.c.l.b16 %v769
    %v841 = vunpack.c.l.b16 %v770
    %v842 = vunpack.c.l.b16 %v771
    %v843 = vunpack.c.l.b16 %v772
    %v844 = vunpack.c.l.b16 %v773
    %v845 = vunpack.c.l.b16 %v774
    %v846 = vunpack.c.l.b16 %v775
    %v847 = vunpack.c.l.b16 %v776
    %v848 = vunpack.c.l.b16 %v777
    %v849 = vunpack.c.l.b16 %v778
    %v850 = vunpack.c.l.b16 %v779
    %v851 = vunpack.c.l.b16 %v780
    %v852 = vunpack.c.l.b16 %v781
    %v853 = vunpack.c.l.b16 %v782
    %v854 = vunpack.c.l.b16 %v783
    %v855 = vunpack.c.l.b16 %v784
    %v856 = vunpack.c.l.b16 %v785
    %v857 = vunpack.c.l.b16 %v786
    %v858 = vunpack.c.l.b16 %v787
    %v859 = vunpack.c.l.b16 %v788
    %v860 = vunpack.c.l.b16 %v789
    %v861 = vunpack.c.l.b16 %v790
    %v862 = vunpack.c.l.b16 %v791
    %v863 = vunpack.c.l.b16 %v792
    %v864 = vunpack.c.l.b16 %v793
    %v865 = vunpack.c.l.b16 %v794
    %v866 = vunpack.c.l.b16 %v795
    %v867 = vpack.c.b16 %v836, %v835
    %v868 = vpack.c.b16 %v838, %v837
    %v869 = vpack.c.b16 %v840, %v839
    %v870 = vpack.c.b16 %v842, %v841
    %v871 = vpack.c.b16 %v844, %v843
    %v872 = vpack.c.b16 %v846, %v845
    %v873 = vpack.c.b16 %v848, %v847
    %v874 = vpack.c.b16 %v850, %v849
    %v875 = vpack.c.b16 %v852, %v851
    %v876 = vpack.c.b16 %v854, %v853
    %v877 = vpack.c.b16 %v856, %v855
    %v878 = vpack.c.b16 %v858, %v857
    %v879 = vpack.c.b16 %v860, %v859
    %v880 = vpack.c.b16 %v862, %v861
    %v881 = vpack.c.b16 %v864, %v863
    %v882 = vpack.c.b16 %v866, %v865
    %899 = vmatprep.subr.bf16.mxu0 0
    %900 = vmatpush1.bf16.msra.mxu0 %v874
    %901 = vmatprep.subr.bf16.mxu0 0
    %902 = vmatpush1.bf16.msra.mxu0 %v873
    %903 = vmatprep.subr.bf16.mxu0 0
    %904 = vmatpush1.bf16.msra.mxu0 %v872
    %905 = vmatprep.subr.bf16.mxu0 0
    %906 = vmatpush1.bf16.msra.mxu0 %v871
    %907 = vmatprep.subr.bf16.mxu0 0
    %908 = vmatpush1.bf16.msra.mxu0 %v870
    %909 = vmatprep.subr.bf16.mxu0 0
    %910 = vmatpush1.bf16.msra.mxu0 %v869
    %911 = vmatprep.subr.bf16.mxu0 0
    %912 = vmatpush1.bf16.msra.mxu0 %v868
    %913 = vmatprep.subr.bf16.mxu0 0
    %914 = vmatpush1.bf16.msra.mxu0 %v867
    %915 = vmatprep.subr.bf16.mxu0 0
    %916 = vmatpush2.bf16.msra.mxu0 %v882
    %917 = vmatprep.subr.bf16.mxu0 0
    %918 = vmatpush2.bf16.msra.mxu0 %v881
    %919 = vmatprep.subr.bf16.mxu0 0
    %920 = vmatpush2.bf16.msra.mxu0 %v880
    %921 = vmatprep.subr.bf16.mxu0 0
    %922 = vmatpush2.bf16.msra.mxu0 %v879
    %923 = vmatprep.subr.bf16.mxu0 0
    %924 = vmatpush2.bf16.msra.mxu0 %v878
    %925 = vmatprep.subr.bf16.mxu0 0
    %926 = vmatpush2.bf16.msra.mxu0 %v877
    %927 = vmatprep.subr.bf16.mxu0 0
    %928 = vmatpush2.bf16.msra.mxu0 %v876
    %929 = vmatprep.subr.bf16.mxu0 0
    %930 = vmatpush2.bf16.msra.mxu0 %v875
    %931 = vmatprep.mubr.bf16.mxu0 %v763
    %932 = vmatmul.mubr.bf16.gmra.mxu0 %v762
    %v933 = vpop.f32.mrf.mxu0
    %v934 = vadd.f32 %v801, %v933
    %v935 = vpop.f32.mrf.mxu0
    %v936 = vpop.f32.mrf.mxu0
    %v937 = vpop.f32.mrf.mxu0
    %938 = vdwg.mxu0
    %v939 = vmax.f32 %v934, 0.0
    %v940 = vpack.c.bf16 %v939, %v939
    %v941 = vld [vmem:[#allocation8 + $0x140] sm:$0xf]
    %v942 = vld [vmem:[#allocation8 + $0x144] sm:$0xf]
    %v943 = vld [vmem:[#allocation8 + $0x148] sm:$0xf]
    %v944 = vld [vmem:[#allocation8 + $0x14c] sm:$0xf]
    %v945 = vld [vmem:[#allocation8 + $0x150] sm:$0xf]
    %v946 = vld [vmem:[#allocation8 + $0x154] sm:$0xf]
    %v947 = vld [vmem:[#allocation8 + $0x158] sm:$0xf]
    %v948 = vld [vmem:[#allocation8 + $0x15c] sm:$0xf]
    %v949 = vld [vmem:[#allocation8 + $0x160] sm:$0xf]
    %v950 = vld [vmem:[#allocation8 + $0x164] sm:$0xf]
    %v951 = vld [vmem:[#allocation8 + $0x168] sm:$0xf]
    %v952 = vld [vmem:[#allocation8 + $0x16c] sm:$0xf]
    %v953 = vld [vmem:[#allocation8 + $0x170] sm:$0xf]
    %v954 = vld [vmem:[#allocation8 + $0x174] sm:$0xf]
    %v955 = vld [vmem:[#allocation8 + $0x178] sm:$0xf]
    %v956 = vld [vmem:[#allocation8 + $0x17c] sm:$0xf]
    %v957 = vld [vmem:[#allocation10 + $0x6] sm:$0x1]
    %v959 = vlaneseq
    %v960 = vshrl.u32 %v959, 7
    %v961 = vsub.s32 0, %v960
    %v962 = vrot.slane %v957, %v961
    %v980 = vunpack.c.l.b16 %v941
    %v981 = vunpack.c.l.b16 %v942
    %v982 = vunpack.c.l.b16 %v943
    %v983 = vunpack.c.l.b16 %v944
    %v984 = vunpack.c.l.b16 %v945
    %v985 = vunpack.c.l.b16 %v946
    %v986 = vunpack.c.l.b16 %v947
    %v987 = vunpack.c.l.b16 %v948
    %v988 = vunpack.c.l.b16 %v949
    %v989 = vunpack.c.l.b16 %v950
    %v990 = vunpack.c.l.b16 %v951
    %v991 = vunpack.c.l.b16 %v952
    %v992 = vunpack.c.l.b16 %v953
    %v993 = vunpack.c.l.b16 %v954
    %v994 = vunpack.c.l.b16 %v955
    %v995 = vunpack.c.l.b16 %v956
    %v996 = vpack.c.b16 %v981, %v980
    %v997 = vpack.c.b16 %v983, %v982
    %v998 = vpack.c.b16 %v985, %v984
    %v999 = vpack.c.b16 %v987, %v986
    %v1000 = vpack.c.b16 %v989, %v988
    %v1001 = vpack.c.b16 %v991, %v990
    %v1002 = vpack.c.b16 %v993, %v992
    %v1003 = vpack.c.b16 %v995, %v994
    %1012 = vmatprep.subr.bf16.mxu0 0
    %1013 = vmatpush1.bf16.msra.mxu0 %v1003
    %1014 = vmatprep.subr.bf16.mxu0 0
    %1015 = vmatpush1.bf16.msra.mxu0 %v1002
    %1016 = vmatprep.subr.bf16.mxu0 0
    %1017 = vmatpush1.bf16.msra.mxu0 %v1001
    %1018 = vmatprep.subr.bf16.mxu0 0
    %1019 = vmatpush1.bf16.msra.mxu0 %v1000
    %1020 = vmatprep.subr.bf16.mxu0 0
    %1021 = vmatpush1.bf16.msra.mxu0 %v999
    %1022 = vmatprep.subr.bf16.mxu0 0
    %1023 = vmatpush1.bf16.msra.mxu0 %v998
    %1024 = vmatprep.subr.bf16.mxu0 0
    %1025 = vmatpush1.bf16.msra.mxu0 %v997
    %1026 = vmatprep.subr.bf16.mxu0 0
    %1027 = vmatpush1.bf16.msra.mxu0 %v996
    %1028 = vmatprep.subr.bf16.mxu0 0
    %1029 = vmatpush2.bf16.msra.mxu0 0
    %1030 = vmatprep.subr.bf16.mxu0 0
    %1031 = vmatpush2.bf16.msra.mxu0 0
    %1032 = vmatprep.subr.bf16.mxu0 0
    %1033 = vmatpush2.bf16.msra.mxu0 0
    %1034 = vmatprep.subr.bf16.mxu0 0
    %1035 = vmatpush2.bf16.msra.mxu0 0
    %1036 = vmatprep.subr.bf16.mxu0 0
    %1037 = vmatpush2.bf16.msra.mxu0 0
    %1038 = vmatprep.subr.bf16.mxu0 0
    %1039 = vmatpush2.bf16.msra.mxu0 0
    %1040 = vmatprep.subr.bf16.mxu0 0
    %1041 = vmatpush2.bf16.msra.mxu0 0
    %1042 = vmatprep.subr.bf16.mxu0 0
    %1043 = vmatpush2.bf16.msra.mxu0 0
    %1044 = vmatprep.mubr.bf16.mxu0 0
    %1045 = vmatmul.mubr.bf16.gmra.mxu0 %v940
    %v1046 = vpop.f32.mrf.mxu0
    %v1047 = vadd.f32 %v962, %v1046
    %v1048 = vpop.f32.mrf.mxu0
    %v1049 = vpop.f32.mrf.mxu0
    %v1050 = vpop.f32.mrf.mxu0
    %1051 = vdwg.mxu0
    %v1052 = vmax.f32 %v1047, 0.0
    %v1053 = vld [vmem:[#allocation10 + $0x7] sm:$0x1]
    %v1055 = vlaneseq
    %v1056 = vshrl.u32 %v1055, 7
    %v1057 = vsub.s32 0, %v1056
    %v1058 = vrot.slane %v1053, %v1057
    %v1060 = vmul.f32 %v1052, %v1058
    %1061 = vadd.xlane.f32.xlu0 %v1060
    %v1062 = vpop.xlane.xlu0 %1061
    %v1063 = vmul.f32 %v757, %v757
    %1064 = vadd.xlane.f32.xlu0 %v1063
    %v1065 = vpop.xlane.xlu0 %1064
    %v1066 = vmax.f32 %v1065, 1e-24
    %v1067 = vrsqrt.pop %v1066
    %v1068 = vmul.f32 %v1062, %v1067
    %v1069 = vmul.f32 %v757, %v1068
    %1070 = vst [vmem:[#allocation11] sm:$0xff] %v1069
    // Predicated region
    $region42: #{tpu_custom_call.1} parent=1 // pred_check
      _
    $region43: #{tpu_custom_call.1} parent=1 // pred_check_branch
      %1072 = sbr.rel (0) target = $region45
    $region44: #{tpu_custom_call.1} parent=1 // pred_region
      %s1074 = ssub.s32 128, 128
      %1075 = vsyncadd [#allocation4], %s1074
      %s1077 = sshll.u32 [#allocation11], 4
      %s1078 = int_to_ptr.vmem [resolvable:$true] %s1077
      %1080 = dma.vmem_to_hbm [thread:$0]  %s1078, 128, %s5, [#allocation4]
    $region45: #{tpu_custom_call.1} parent=1 // pred_fallthru
      _
    // Predicated region
    $region46: #{tpu_custom_call.1} parent=1 // pred_check
      _
    $region47: #{tpu_custom_call.1} parent=1 // pred_check_branch
      %1082 = sbr.rel (0) target = $region49
    $region48: #{tpu_custom_call.1} parent=1 // pred_region
      %1083 = dma.done [#allocation4], 128
    $region49: #{tpu_custom_call.1} parent=1 // pred_fallthru
      _
    %1084 = vsyncpa [#allocation3], 1
    %1085 = vsyncpa [#allocation6], 1
    %1086 = vsyncpa [#allocation9], 1
    %1087 = vsyncpa [#allocation4], 1

</llo_original>
